<compile_context>
chip_gen: v7x
topology: tpu7x:2x2x1
jax: 0.10.0
libtpu: 0.0.40
codegen_flags: <defaults>
</compile_context>

<pallas_src>
import jax
import jax.numpy as jnp
from jax.experimental import pallas as pl
from jax.experimental.pallas import tpu as pltpu


def regression_head_kernel(x_ref, w_ref, b_ref, o_ref):
    # x_ref: (TN, HW, C) native dtype  (C on lanes, HW on sublanes)
    # w_ref: (C, O) f32, pre-scaled by 1/(H*W)
    # b_ref: (1, O) f32
    # o_ref: (TN, O) f32
    x = x_ref[...].astype(jnp.float32)          # cast after load; f32 accumulation
    pooled = jnp.sum(x, axis=1)                 # (TN, C) sublane-axis reduction
    out = jnp.dot(pooled, w_ref[...], preferred_element_type=jnp.float32)
    o_ref[...] = out + b_ref[...]               # broadcast bias over batch tile


def regression_head(x_nchw, weight, bias, *, tile_n=8):
    """x_nchw: (N, C, H, W); weight: (O, C) PyTorch convention; bias: (O,)."""
    N, C, H, W = x_nchw.shape
    O = weight.shape[0]
    HW = H * W

    # Channels-last for the kernel: (N, HW, C). In a full model the producer conv
    # would ideally emit this layout directly; here the one-pass transpose is cheap
    # relative to the head itself.
    x3 = jnp.transpose(x_nchw.reshape(N, C, HW), (0, 2, 1))   # (N, HW, C), native dtype

    # Fold the average-pool scale into the (C, O) weight once (kernel does sum, not mean).
    w_t = (jnp.transpose(weight).astype(jnp.float32) * (1.0 / HW))  # (C, O)
    b2 = bias.reshape(1, O).astype(jnp.float32)

    TN = min(tile_n, N)
    grid = (pl.cdiv(N, TN),)

    return pl.pallas_call(
        regression_head_kernel,
        out_shape=jax.ShapeDtypeStruct((N, O), jnp.float32),
        grid_spec=pltpu.PrefetchScalarGridSpec(
            num_scalar_prefetch=0,
            grid=grid,
            in_specs=[
                pl.BlockSpec((TN, HW, C), lambda i: (i, 0, 0)),   # batch tile of x
                pl.BlockSpec((C, O), lambda i: (0, 0)),           # weight, resident
                pl.BlockSpec((1, O), lambda i: (0, 0)),           # bias, resident
            ],
            out_specs=pl.BlockSpec((TN, O), lambda i: (i, 0)),
        ),
        compiler_params=pltpu.CompilerParams(
            dimension_semantics=("parallel",),   # shard batch tiles across TCs (v7x)
        ),
    )(x3, w_t, b2)


if __name__ == "__main__":
    # Shapes implied by the module: in_channels = resnet18.fc.in_features = 512,
    # small spatial map, small regression output.
    N, C, H, W = 2, 512, 8, 8
    num_outputs = 3

    key = jax.random.PRNGKey(0)
    kx, kw, kb = jax.random.split(key, 3)

    x = jax.random.normal(kx, (N, C, H, W), dtype=jnp.float32)

    # Deterministic Linear init (PyTorch-style uniform(-1/sqrt(C), 1/sqrt(C))).
    bound = 1.0 / jnp.sqrt(jnp.float32(C))
    weight = jax.random.uniform(kw, (num_outputs, C), jnp.float32, -bound, bound)
    bias = jax.random.uniform(kb, (num_outputs,), jnp.float32, -bound, bound)

    out = regression_head(x, weight, bias)
    out = jax.block_until_ready(out)

    # Pure-JAX reference check (AdaptiveAvgPool2d(1) -> flatten -> Linear).
    ref = jnp.mean(x, axis=(2, 3)) @ weight.T + bias
    assert out.shape == (N, num_outputs)
    assert jnp.allclose(out, ref, atol=1e-4, rtol=1e-4), (out, ref)

    print("KERNEL_OK")
</pallas_src>

<mosaic_0001>
module attributes {stable_mosaic.version = 11 : i64} {
  func.func @regression_head_kernel(%arg0: i32, %arg1: memref<2x64x512xf32, #tpu.memory_space<vmem>>, %arg2: memref<512x3xf32, #tpu.memory_space<vmem>>, %arg3: memref<1x3xf32, #tpu.memory_space<vmem>>, %arg4: memref<2x3xf32, #tpu.memory_space<vmem>>) attributes {dimension_semantics = [#tpu.dimension_semantics<parallel>], iteration_bounds = array<i64: 1>, scalar_prefetch = 0 : i64, scratch_operands = 0 : i64, tpu.core_type = #tpu.core_type<tc>, window_params = [{transform_indices = @transform_0, window_bounds = array<i64: 2, 64, 512>}, {pipeline_mode = #tpu.pipeline_mode<synchronous>, transform_indices = @transform_1, window_bounds = array<i64: 512, 3>}, {pipeline_mode = #tpu.pipeline_mode<synchronous>, transform_indices = @transform_2, window_bounds = array<i64: 1, 3>}, {transform_indices = @transform_3, window_bounds = array<i64: 2, 3>}]} {
    %c0 = arith.constant 0 : index
    %c0_0 = arith.constant 0 : index
    %c0_1 = arith.constant 0 : index
    %0 = vector.load %arg1[%c0, %c0_0, %c0_1] : memref<2x64x512xf32, #tpu.memory_space<vmem>>, vector<2x64x512xf32>
    %cst = arith.constant dense<0.000000e+00> : vector<2x512xf32>
    %1 = vector.multi_reduction <add>, %0, %cst [1] : vector<2x64x512xf32> to vector<2x512xf32>
    %c0_2 = arith.constant 0 : index
    %c0_3 = arith.constant 0 : index
    %2 = vector.load %arg2[%c0_2, %c0_3] : memref<512x3xf32, #tpu.memory_space<vmem>>, vector<512x3xf32>
    %cst_4 = arith.constant dense<0.000000e+00> : vector<2x3xf32>
    %3 = tpu.matmul %1, %2, %cst_4 {dimension_numbers = #tpu.dot_dimension_numbers<[1], [0], [0], [1], [0, 0, 1, 1], [], []>} : vector<2x512xf32>, vector<512x3xf32>, vector<2x3xf32> -> vector<2x3xf32>
    %c0_5 = arith.constant 0 : index
    %c0_6 = arith.constant 0 : index
    %4 = vector.load %arg3[%c0_5, %c0_6] : memref<1x3xf32, #tpu.memory_space<vmem>>, vector<1x3xf32>
    %5 = vector.broadcast %4 : vector<1x3xf32> to vector<2x3xf32>
    %6 = arith.addf %3, %5 : vector<2x3xf32>
    %c0_7 = arith.constant 0 : index
    %c0_8 = arith.constant 0 : index
    %7 = vector.load %arg4[%c0_7, %c0_8] : memref<2x3xf32, #tpu.memory_space<vmem>>, vector<2x3xf32>
    tpu.vector_store %arg4[%c0_7, %c0_8], %6 {strides = array<i32>} : memref<2x3xf32, #tpu.memory_space<vmem>>, vector<2x3xf32>,
    return
  }
  func.func @transform_0(%arg0: i32) -> (i32, i32, i32) {
    %c0_i32 = arith.constant 0 : i32
    %c0_i32_0 = arith.constant 0 : i32
    %c0_i32_1 = arith.constant 0 : i32
    return %arg0, %c0_i32, %c0_i32_0 : i32, i32, i32
  }
  func.func @transform_1(%arg0: i32) -> (i32, i32) {
    %c0_i32 = arith.constant 0 : i32
    %c0_i32_0 = arith.constant 0 : i32
    %c0_i32_1 = arith.constant 0 : i32
    return %c0_i32, %c0_i32_0 : i32, i32
  }
  func.func @transform_2(%arg0: i32) -> (i32, i32) {
    %c0_i32 = arith.constant 0 : i32
    %c0_i32_0 = arith.constant 0 : i32
    %c0_i32_1 = arith.constant 0 : i32
    return %c0_i32, %c0_i32_0 : i32, i32
  }
  func.func @transform_3(%arg0: i32) -> (i32, i32) {
    %c0_i32 = arith.constant 0 : i32
    %c0_i32_0 = arith.constant 0 : i32
    return %arg0, %c0_i32 : i32, i32
  }
}

</mosaic_0001>

<llo_original>
// kernel: tpu_custom_call.1
$region0: #{tpu_custom_call.1}
  #allocation0 [shape = 'u32[]', space=smem, size = 0x4, offset = 0x4, fixed_abs, tag = 'smem constant byte address 0x4 - core index']
  #allocation1 [shape = 'u32[144,128]{1,0:T(1,128)}', space=vmem, size = 0x12000, scoped, tag = 'internal scratch']
  %s0 = inlined_call_operand.vmem [shape: f32[2,64,512], index: 0, kind: input, shape index: {}]
  %s1 = inlined_call_operand.vmem [shape: f32[512,3], index: 1, kind: input, shape index: {}]
  %s2 = inlined_call_operand.vmem [shape: f32[1,3], index: 2, kind: input, shape index: {}]
  %s3 = inlined_call_operand.hbm [shape: f32[2,3], index: 3, kind: output, shape index: {}]
  %s4 = sld [smem:[#allocation0]]
  $region22: #{tpu_custom_call.1} parent=0
    _
  %s6 = ssub.s32 1, %s4
  %s7 = scalar_select 0, %s6, %s4
  $region1: #{tpu_custom_call.1} parent=0
    #allocation2 [shape = 'u8[1024]{0}', space=vmem, size = 0x400, scoped, tag = 'output window, operand 0, single buffered']
    #allocation3 [shape = 's32[1]{0}', space=sflag, size = 0x4, scoped, tag = 'scoped memory for tpu_custom_call.1']
    %8 = vsyncpa [#allocation3], 0
    // Predicated region
    $region2: #{tpu_custom_call.1} parent=1 // pred_check
      _
    $region3: #{tpu_custom_call.1} parent=1 // pred_check_branch
      %10 = sbr.rel (0) target = $region5
    $region4: #{tpu_custom_call.1} parent=1 // pred_region
      _
    $region5: #{tpu_custom_call.1} parent=1 // pred_fallthru
      _
    // Predicated region
    $region6: #{tpu_custom_call.1} parent=1 // pred_check
      _
    $region7: #{tpu_custom_call.1} parent=1 // pred_check_branch
      %12 = sbr.rel (0) target = $region9
    $region8: #{tpu_custom_call.1} parent=1 // pred_region
      _
    $region9: #{tpu_custom_call.1} parent=1 // pred_fallthru
      _
    // Predicated region
    $region10: #{tpu_custom_call.1} parent=1 // pred_check
      _
    $region11: #{tpu_custom_call.1} parent=1 // pred_check_branch
      %14 = sbr.rel (0) target = $region13
    $region12: #{tpu_custom_call.1} parent=1 // pred_region
      _
    $region13: #{tpu_custom_call.1} parent=1 // pred_fallthru
      _
    %v15 = vld [vmem:[%s0] sm:$0xff]
    %v16 = vld [vmem:[%s0 + $0x8] sm:$0xff]
    %v17 = vld [vmem:[%s0 + $0x10] sm:$0xff]
    %v18 = vld [vmem:[%s0 + $0x18] sm:$0xff]
    %v19 = vld [vmem:[%s0 + $0x20] sm:$0xff]
    %v20 = vld [vmem:[%s0 + $0x28] sm:$0xff]
    %v21 = vld [vmem:[%s0 + $0x30] sm:$0xff]
    %v22 = vld [vmem:[%s0 + $0x38] sm:$0xff]
    %v23 = vld [vmem:[%s0 + $0x40] sm:$0xff]
    %v24 = vld [vmem:[%s0 + $0x48] sm:$0xff]
    %v25 = vld [vmem:[%s0 + $0x50] sm:$0xff]
    %v26 = vld [vmem:[%s0 + $0x58] sm:$0xff]
    %v27 = vld [vmem:[%s0 + $0x60] sm:$0xff]
    %v28 = vld [vmem:[%s0 + $0x68] sm:$0xff]
    %v29 = vld [vmem:[%s0 + $0x70] sm:$0xff]
    %v30 = vld [vmem:[%s0 + $0x78] sm:$0xff]
    %v31 = vld [vmem:[%s0 + $0x80] sm:$0xff]
    %v32 = vld [vmem:[%s0 + $0x88] sm:$0xff]
    %v33 = vld [vmem:[%s0 + $0x90] sm:$0xff]
    %v34 = vld [vmem:[%s0 + $0x98] sm:$0xff]
    %v35 = vld [vmem:[%s0 + $0xa0] sm:$0xff]
    %v36 = vld [vmem:[%s0 + $0xa8] sm:$0xff]
    %v37 = vld [vmem:[%s0 + $0xb0] sm:$0xff]
    %v38 = vld [vmem:[%s0 + $0xb8] sm:$0xff]
    %v39 = vld [vmem:[%s0 + $0xc0] sm:$0xff]
    %v40 = vld [vmem:[%s0 + $0xc8] sm:$0xff]
    %v41 = vld [vmem:[%s0 + $0xd0] sm:$0xff]
    %v42 = vld [vmem:[%s0 + $0xd8] sm:$0xff]
    %v43 = vld [vmem:[%s0 + $0xe0] sm:$0xff]
    %v44 = vld [vmem:[%s0 + $0xe8] sm:$0xff]
    %v45 = vld [vmem:[%s0 + $0xf0] sm:$0xff]
    %v46 = vld [vmem:[%s0 + $0xf8] sm:$0xff]
    %v47 = vld [vmem:[%s0 + $0x100] sm:$0xff]
    %v48 = vld [vmem:[%s0 + $0x108] sm:$0xff]
    %v49 = vld [vmem:[%s0 + $0x110] sm:$0xff]
    %v50 = vld [vmem:[%s0 + $0x118] sm:$0xff]
    %v51 = vld [vmem:[%s0 + $0x120] sm:$0xff]
    %v52 = vld [vmem:[%s0 + $0x128] sm:$0xff]
    %v53 = vld [vmem:[%s0 + $0x130] sm:$0xff]
    %v54 = vld [vmem:[%s0 + $0x138] sm:$0xff]
    %v55 = vld [vmem:[%s0 + $0x140] sm:$0xff]
    %v56 = vld [vmem:[%s0 + $0x148] sm:$0xff]
    %v57 = vld [vmem:[%s0 + $0x150] sm:$0xff]
    %v58 = vld [vmem:[%s0 + $0x158] sm:$0xff]
    %v59 = vld [vmem:[%s0 + $0x160] sm:$0xff]
    %v60 = vld [vmem:[%s0 + $0x168] sm:$0xff]
    %v61 = vld [vmem:[%s0 + $0x170] sm:$0xff]
    %v62 = vld [vmem:[%s0 + $0x178] sm:$0xff]
    %v63 = vld [vmem:[%s0 + $0x180] sm:$0xff]
    %v64 = vld [vmem:[%s0 + $0x188] sm:$0xff]
    %v65 = vld [vmem:[%s0 + $0x190] sm:$0xff]
    %v66 = vld [vmem:[%s0 + $0x198] sm:$0xff]
    %v67 = vld [vmem:[%s0 + $0x1a0] sm:$0xff]
    %v68 = vld [vmem:[%s0 + $0x1a8] sm:$0xff]
    %v69 = vld [vmem:[%s0 + $0x1b0] sm:$0xff]
    %v70 = vld [vmem:[%s0 + $0x1b8] sm:$0xff]
    %v71 = vld [vmem:[%s0 + $0x1c0] sm:$0xff]
    %v72 = vld [vmem:[%s0 + $0x1c8] sm:$0xff]
    %v73 = vld [vmem:[%s0 + $0x1d0] sm:$0xff]
    %v74 = vld [vmem:[%s0 + $0x1d8] sm:$0xff]
    %v75 = vld [vmem:[%s0 + $0x1e0] sm:$0xff]
    %v76 = vld [vmem:[%s0 + $0x1e8] sm:$0xff]
    %v77 = vld [vmem:[%s0 + $0x1f0] sm:$0xff]
    %v78 = vld [vmem:[%s0 + $0x1f8] sm:$0xff]
    %v79 = vadd.f32 %v15, %v19
    %v80 = vadd.f32 %v79, %v23
    %v81 = vadd.f32 %v80, %v27
    %v82 = vadd.f32 %v81, %v31
    %v83 = vadd.f32 %v82, %v35
    %v84 = vadd.f32 %v83, %v39
    %v85 = vadd.f32 %v84, %v43
    %v86 = vrot.slane %v85, 4
    %v87 = vadd.f32 %v85, %v86
    %v88 = vrot.slane %v87, 2
    %v89 = vadd.f32 %v87, %v88
    %v90 = vrot.slane %v89, 1
    %v91 = vadd.f32 %v89, %v90
    %v92 = vadd.f32 %v16, %v20
    %v93 = vadd.f32 %v92, %v24
    %v94 = vadd.f32 %v93, %v28
    %v95 = vadd.f32 %v94, %v32
    %v96 = vadd.f32 %v95, %v36
    %v97 = vadd.f32 %v96, %v40
    %v98 = vadd.f32 %v97, %v44
    %v99 = vrot.slane %v98, 4
    %v100 = vadd.f32 %v98, %v99
    %v101 = vrot.slane %v100, 2
    %v102 = vadd.f32 %v100, %v101
    %v103 = vrot.slane %v102, 1
    %v104 = vadd.f32 %v102, %v103
    %v105 = vadd.f32 %v17, %v21
    %v106 = vadd.f32 %v105, %v25
    %v107 = vadd.f32 %v106, %v29
    %v108 = vadd.f32 %v107, %v33
    %v109 = vadd.f32 %v108, %v37
    %v110 = vadd.f32 %v109, %v41
    %v111 = vadd.f32 %v110, %v45
    %v112 = vrot.slane %v111, 4
    %v113 = vadd.f32 %v111, %v112
    %v114 = vrot.slane %v113, 2
    %v115 = vadd.f32 %v113, %v114
    %v116 = vrot.slane %v115, 1
    %v117 = vadd.f32 %v115, %v116
    %v118 = vadd.f32 %v18, %v22
    %v119 = vadd.f32 %v118, %v26
    %v120 = vadd.f32 %v119, %v30
    %v121 = vadd.f32 %v120, %v34
    %v122 = vadd.f32 %v121, %v38
    %v123 = vadd.f32 %v122, %v42
    %v124 = vadd.f32 %v123, %v46
    %v125 = vrot.slane %v124, 4
    %v126 = vadd.f32 %v124, %v125
    %v127 = vrot.slane %v126, 2
    %v128 = vadd.f32 %v126, %v127
    %v129 = vrot.slane %v128, 1
    %v130 = vadd.f32 %v128, %v129
    %v131 = vadd.f32 %v47, %v51
    %v132 = vadd.f32 %v131, %v55
    %v133 = vadd.f32 %v132, %v59
    %v134 = vadd.f32 %v133, %v63
    %v135 = vadd.f32 %v134, %v67
    %v136 = vadd.f32 %v135, %v71
    %v137 = vadd.f32 %v136, %v75
    %v138 = vrot.slane %v137, 4
    %v139 = vadd.f32 %v137, %v138
    %v140 = vrot.slane %v139, 2
    %v141 = vadd.f32 %v139, %v140
    %v142 = vrot.slane %v141, 1
    %v143 = vadd.f32 %v141, %v142
    %v144 = vadd.f32 %v48, %v52
    %v145 = vadd.f32 %v144, %v56
    %v146 = vadd.f32 %v145, %v60
    %v147 = vadd.f32 %v146, %v64
    %v148 = vadd.f32 %v147, %v68
    %v149 = vadd.f32 %v148, %v72
    %v150 = vadd.f32 %v149, %v76
    %v151 = vrot.slane %v150, 4
    %v152 = vadd.f32 %v150, %v151
    %v153 = vrot.slane %v152, 2
    %v154 = vadd.f32 %v152, %v153
    %v155 = vrot.slane %v154, 1
    %v156 = vadd.f32 %v154, %v155
    %v157 = vadd.f32 %v49, %v53
    %v158 = vadd.f32 %v157, %v57
    %v159 = vadd.f32 %v158, %v61
    %v160 = vadd.f32 %v159, %v65
    %v161 = vadd.f32 %v160, %v69
    %v162 = vadd.f32 %v161, %v73
    %v163 = vadd.f32 %v162, %v77
    %v164 = vrot.slane %v163, 4
    %v165 = vadd.f32 %v163, %v164
    %v166 = vrot.slane %v165, 2
    %v167 = vadd.f32 %v165, %v166
    %v168 = vrot.slane %v167, 1
    %v169 = vadd.f32 %v167, %v168
    %v170 = vadd.f32 %v50, %v54
    %v171 = vadd.f32 %v170, %v58
    %v172 = vadd.f32 %v171, %v62
    %v173 = vadd.f32 %v172, %v66
    %v174 = vadd.f32 %v173, %v70
    %v175 = vadd.f32 %v174, %v74
    %v176 = vadd.f32 %v175, %v78
    %v177 = vrot.slane %v176, 4
    %v178 = vadd.f32 %v176, %v177
    %v179 = vrot.slane %v178, 2
    %v180 = vadd.f32 %v178, %v179
    %v181 = vrot.slane %v180, 1
    %v182 = vadd.f32 %v180, %v181
    %v183 = vld [vmem:[%s1] sm:$0xff]
    %v184 = vld [vmem:[%s1 + $0x8] sm:$0xff]
    %v185 = vld [vmem:[%s1 + $0x10] sm:$0xff]
    %v186 = vld [vmem:[%s1 + $0x18] sm:$0xff]
    %v187 = vld [vmem:[%s1 + $0x20] sm:$0xff]
    %v188 = vld [vmem:[%s1 + $0x28] sm:$0xff]
    %v189 = vld [vmem:[%s1 + $0x30] sm:$0xff]
    %v190 = vld [vmem:[%s1 + $0x38] sm:$0xff]
    %v191 = vld [vmem:[%s1 + $0x40] sm:$0xff]
    %v192 = vld [vmem:[%s1 + $0x48] sm:$0xff]
    %v193 = vld [vmem:[%s1 + $0x50] sm:$0xff]
    %v194 = vld [vmem:[%s1 + $0x58] sm:$0xff]
    %v195 = vld [vmem:[%s1 + $0x60] sm:$0xff]
    %v196 = vld [vmem:[%s1 + $0x68] sm:$0xff]
    %v197 = vld [vmem:[%s1 + $0x70] sm:$0xff]
    %v198 = vld [vmem:[%s1 + $0x78] sm:$0xff]
    %v199 = vld [vmem:[%s1 + $0x80] sm:$0xff]
    %v200 = vld [vmem:[%s1 + $0x88] sm:$0xff]
    %v201 = vld [vmem:[%s1 + $0x90] sm:$0xff]
    %v202 = vld [vmem:[%s1 + $0x98] sm:$0xff]
    %v203 = vld [vmem:[%s1 + $0xa0] sm:$0xff]
    %v204 = vld [vmem:[%s1 + $0xa8] sm:$0xff]
    %v205 = vld [vmem:[%s1 + $0xb0] sm:$0xff]
    %v206 = vld [vmem:[%s1 + $0xb8] sm:$0xff]
    %v207 = vld [vmem:[%s1 + $0xc0] sm:$0xff]
    %v208 = vld [vmem:[%s1 + $0xc8] sm:$0xff]
    %v209 = vld [vmem:[%s1 + $0xd0] sm:$0xff]
    %v210 = vld [vmem:[%s1 + $0xd8] sm:$0xff]
    %v211 = vld [vmem:[%s1 + $0xe0] sm:$0xff]
    %v212 = vld [vmem:[%s1 + $0xe8] sm:$0xff]
    %v213 = vld [vmem:[%s1 + $0xf0] sm:$0xff]
    %v214 = vld [vmem:[%s1 + $0xf8] sm:$0xff]
    %v215 = vld [vmem:[%s1 + $0x100] sm:$0xff]
    %v216 = vld [vmem:[%s1 + $0x108] sm:$0xff]
    %v217 = vld [vmem:[%s1 + $0x110] sm:$0xff]
    %v218 = vld [vmem:[%s1 + $0x118] sm:$0xff]
    %v219 = vld [vmem:[%s1 + $0x120] sm:$0xff]
    %v220 = vld [vmem:[%s1 + $0x128] sm:$0xff]
    %v221 = vld [vmem:[%s1 + $0x130] sm:$0xff]
    %v222 = vld [vmem:[%s1 + $0x138] sm:$0xff]
    %v223 = vld [vmem:[%s1 + $0x140] sm:$0xff]
    %v224 = vld [vmem:[%s1 + $0x148] sm:$0xff]
    %v225 = vld [vmem:[%s1 + $0x150] sm:$0xff]
    %v226 = vld [vmem:[%s1 + $0x158] sm:$0xff]
    %v227 = vld [vmem:[%s1 + $0x160] sm:$0xff]
    %v228 = vld [vmem:[%s1 + $0x168] sm:$0xff]
    %v229 = vld [vmem:[%s1 + $0x170] sm:$0xff]
    %v230 = vld [vmem:[%s1 + $0x178] sm:$0xff]
    %v231 = vld [vmem:[%s1 + $0x180] sm:$0xff]
    %v232 = vld [vmem:[%s1 + $0x188] sm:$0xff]
    %v233 = vld [vmem:[%s1 + $0x190] sm:$0xff]
    %v234 = vld [vmem:[%s1 + $0x198] sm:$0xff]
    %v235 = vld [vmem:[%s1 + $0x1a0] sm:$0xff]
    %v236 = vld [vmem:[%s1 + $0x1a8] sm:$0xff]
    %v237 = vld [vmem:[%s1 + $0x1b0] sm:$0xff]
    %v238 = vld [vmem:[%s1 + $0x1b8] sm:$0xff]
    %v239 = vld [vmem:[%s1 + $0x1c0] sm:$0xff]
    %v240 = vld [vmem:[%s1 + $0x1c8] sm:$0xff]
    %v241 = vld [vmem:[%s1 + $0x1d0] sm:$0xff]
    %v242 = vld [vmem:[%s1 + $0x1d8] sm:$0xff]
    %v243 = vld [vmem:[%s1 + $0x1e0] sm:$0xff]
    %v244 = vld [vmem:[%s1 + $0x1e8] sm:$0xff]
    %v245 = vld [vmem:[%s1 + $0x1f0] sm:$0xff]
    %v246 = vld [vmem:[%s1 + $0x1f8] sm:$0xff]
    %v247 = vld [vmem:[%s2] sm:$0x1]
    %v249 = vlaneseq
    %v250 = vshrl.u32 %v249, 7
    %v251 = vsub.s32 0, %v250
    %v252 = vrot.slane %v247, %v251
    %vm262 = vcmask 1041409
    %v263 = vsel %vm262, %v143, %v91
    %v264 = vsel %vm262, %v156, %v104
    %v265 = vsel %vm262, %v169, %v117
    %v266 = vsel %vm262, %v182, %v130
    %271 = vmatprep.subr.mxu0 0.0
    %272 = vmatpush1.msra.mxu0 %v183
    %273 = vmatprep.subr.mxu0 0.0
    %274 = vmatpush1.msra.mxu0 %v184
    %275 = vmatprep.subr.mxu0 0.0
    %276 = vmatpush1.msra.mxu0 %v185
    %277 = vmatprep.subr.mxu0 0.0
    %278 = vmatpush1.msra.mxu0 %v186
    %279 = vmatprep.subr.mxu0 0.0
    %280 = vmatpush1.msra.mxu0 %v187
    %281 = vmatprep.subr.mxu0 0.0
    %282 = vmatpush1.msra.mxu0 %v188
    %283 = vmatprep.subr.mxu0 0.0
    %284 = vmatpush1.msra.mxu0 %v189
    %285 = vmatprep.subr.mxu0 0.0
    %286 = vmatpush1.msra.mxu0 %v190
    %287 = vmatprep.subr.mxu0 0.0
    %288 = vmatpush1.msra.mxu0 %v191
    %289 = vmatprep.subr.mxu0 0.0
    %290 = vmatpush1.msra.mxu0 %v192
    %291 = vmatprep.subr.mxu0 0.0
    %292 = vmatpush1.msra.mxu0 %v193
    %293 = vmatprep.subr.mxu0 0.0
    %294 = vmatpush1.msra.mxu0 %v194
    %295 = vmatprep.subr.mxu0 0.0
    %296 = vmatpush1.msra.mxu0 %v195
    %297 = vmatprep.subr.mxu0 0.0
    %298 = vmatpush1.msra.mxu0 %v196
    %299 = vmatprep.subr.mxu0 0.0
    %300 = vmatpush1.msra.mxu0 %v197
    %301 = vmatprep.subr.mxu0 0.0
    %302 = vmatpush1.msra.mxu0 %v198
    %303 = vmatprep.subr.mxu0 0.0
    %304 = vmatpush1.msra.mxu0 %v199
    %305 = vmatprep.subr.mxu0 0.0
    %306 = vmatpush1.msra.mxu0 %v200
    %307 = vmatprep.subr.mxu0 0.0
    %308 = vmatpush1.msra.mxu0 %v201
    %309 = vmatprep.subr.mxu0 0.0
    %310 = vmatpush1.msra.mxu0 %v202
    %311 = vmatprep.subr.mxu0 0.0
    %312 = vmatpush1.msra.mxu0 %v203
    %313 = vmatprep.subr.mxu0 0.0
    %314 = vmatpush1.msra.mxu0 %v204
    %315 = vmatprep.subr.mxu0 0.0
    %316 = vmatpush1.msra.mxu0 %v205
    %317 = vmatprep.subr.mxu0 0.0
    %318 = vmatpush1.msra.mxu0 %v206
    %319 = vmatprep.subr.mxu0 0.0
    %320 = vmatpush1.msra.mxu0 %v207
    %321 = vmatprep.subr.mxu0 0.0
    %322 = vmatpush1.msra.mxu0 %v208
    %323 = vmatprep.subr.mxu0 0.0
    %324 = vmatpush1.msra.mxu0 %v209
    %325 = vmatprep.subr.mxu0 0.0
    %326 = vmatpush1.msra.mxu0 %v210
    %327 = vmatprep.subr.mxu0 0.0
    %328 = vmatpush1.msra.mxu0 %v211
    %329 = vmatprep.subr.mxu0 0.0
    %330 = vmatpush1.msra.mxu0 %v212
    %331 = vmatprep.subr.mxu0 0.0
    %332 = vmatpush1.msra.mxu0 %v213
    %333 = vmatprep.subr.mxu0 0.0
    %334 = vmatpush1.msra.mxu0 %v214
    %335 = vmatprep.mubr.f32.mxu0 %v264
    %336 = vmatmul.mubr.f32.gmra.mrb[0].mxu0 %v263
    %v337 = vpop.f32.mrb[0].mxu0
    %v338 = vadd.f32 %v252, %v337
    %v339 = vpop.f32.mrb[0].mxu0
    %340 = vdwg.mxu0
    %341 = vmatprep.subr.mxu0 0.0
    %342 = vmatpush1.msra.mxu0 %v215
    %343 = vmatprep.subr.mxu0 0.0
    %344 = vmatpush1.msra.mxu0 %v216
    %345 = vmatprep.subr.mxu0 0.0
    %346 = vmatpush1.msra.mxu0 %v217
    %347 = vmatprep.subr.mxu0 0.0
    %348 = vmatpush1.msra.mxu0 %v218
    %349 = vmatprep.subr.mxu0 0.0
    %350 = vmatpush1.msra.mxu0 %v219
    %351 = vmatprep.subr.mxu0 0.0
    %352 = vmatpush1.msra.mxu0 %v220
    %353 = vmatprep.subr.mxu0 0.0
    %354 = vmatpush1.msra.mxu0 %v221
    %355 = vmatprep.subr.mxu0 0.0
    %356 = vmatpush1.msra.mxu0 %v222
    %357 = vmatprep.subr.mxu0 0.0
    %358 = vmatpush1.msra.mxu0 %v223
    %359 = vmatprep.subr.mxu0 0.0
    %360 = vmatpush1.msra.mxu0 %v224
    %361 = vmatprep.subr.mxu0 0.0
    %362 = vmatpush1.msra.mxu0 %v225
    %363 = vmatprep.subr.mxu0 0.0
    %364 = vmatpush1.msra.mxu0 %v226
    %365 = vmatprep.subr.mxu0 0.0
    %366 = vmatpush1.msra.mxu0 %v227
    %367 = vmatprep.subr.mxu0 0.0
    %368 = vmatpush1.msra.mxu0 %v228
    %369 = vmatprep.subr.mxu0 0.0
    %370 = vmatpush1.msra.mxu0 %v229
    %371 = vmatprep.subr.mxu0 0.0
    %372 = vmatpush1.msra.mxu0 %v230
    %373 = vmatprep.subr.mxu0 0.0
    %374 = vmatpush1.msra.mxu0 %v231
    %375 = vmatprep.subr.mxu0 0.0
    %376 = vmatpush1.msra.mxu0 %v232
    %377 = vmatprep.subr.mxu0 0.0
    %378 = vmatpush1.msra.mxu0 %v233
    %379 = vmatprep.subr.mxu0 0.0
    %380 = vmatpush1.msra.mxu0 %v234
    %381 = vmatprep.subr.mxu0 0.0
    %382 = vmatpush1.msra.mxu0 %v235
    %383 = vmatprep.subr.mxu0 0.0
    %384 = vmatpush1.msra.mxu0 %v236
    %385 = vmatprep.subr.mxu0 0.0
    %386 = vmatpush1.msra.mxu0 %v237
    %387 = vmatprep.subr.mxu0 0.0
    %388 = vmatpush1.msra.mxu0 %v238
    %389 = vmatprep.subr.mxu0 0.0
    %390 = vmatpush1.msra.mxu0 %v239
    %391 = vmatprep.subr.mxu0 0.0
    %392 = vmatpush1.msra.mxu0 %v240
    %393 = vmatprep.subr.mxu0 0.0
    %394 = vmatpush1.msra.mxu0 %v241
    %395 = vmatprep.subr.mxu0 0.0
    %396 = vmatpush1.msra.mxu0 %v242
    %397 = vmatprep.subr.mxu0 0.0
    %398 = vmatpush1.msra.mxu0 %v243
    %399 = vmatprep.subr.mxu0 0.0
    %400 = vmatpush1.msra.mxu0 %v244
    %401 = vmatprep.subr.mxu0 0.0
    %402 = vmatpush1.msra.mxu0 %v245
    %403 = vmatprep.subr.mxu0 0.0
    %404 = vmatpush1.msra.mxu0 %v246
    %405 = vmatprep.mubr.f32.mxu0 %v266
    %406 = vmatmul.mubr.f32.gmra.mrb[0].mxu0 %v265
    %v407 = vpop.f32.mrb[0].mxu0
    %v408 = vadd.f32 %v338, %v407
    %v409 = vpop.f32.mrb[0].mxu0
    %410 = vdwg.mxu0
    %vm411 = vcmask 17408
    %412 = vst.msk [vmem:[#allocation2] sm:$0x3] %vm411, %v408
    // Predicated region
    $region14: #{tpu_custom_call.1} parent=1 // pred_check
      _
    $region15: #{tpu_custom_call.1} parent=1 // pred_check_branch
      %414 = sbr.rel (0) target = $region17
    $region16: #{tpu_custom_call.1} parent=1 // pred_region
      %s416 = ssub.s32 32, 32
      %417 = vsyncadd [#allocation3], %s416
      %s419 = sshll.u32 [#allocation2], 4
      %s420 = int_to_ptr.vmem [resolvable:$true] %s419
      %422 = dma.vmem_to_hbm [thread:$0]  %s420, 32, %s3, [#allocation3]
    $region17: #{tpu_custom_call.1} parent=1 // pred_fallthru
      _
    // Predicated region
    $region18: #{tpu_custom_call.1} parent=1 // pred_check
      _
    $region19: #{tpu_custom_call.1} parent=1 // pred_check_branch
      %424 = sbr.rel (0) target = $region21
    $region20: #{tpu_custom_call.1} parent=1 // pred_region
      %425 = dma.done [#allocation3], 32
    $region21: #{tpu_custom_call.1} parent=1 // pred_fallthru
      _
    %426 = vsyncpa [#allocation3], 1

</llo_original>
